<compile_context>
chip_gen: v6e
topology: v6e:2x2x1
jax: 0.10.0
libtpu: 0.0.40
codegen_flags: <defaults>
</compile_context>

<pallas_src>
import jax
import jax.numpy as jnp
from jax.experimental import pallas as pl
from jax.experimental.pallas import tpu as pltpu


# --------------------------------- kernel ---------------------------------
def embed_kernel(xp_ref, w_ref, b_ref, pos_ref, o_ref):
    # xp_ref : (1, TN, K)  bf16   patch rows for this (batch, token-tile)
    # w_ref  : (K, D)      bf16   patch-embedding weight (grid-invariant)
    # b_ref  : (1, D)      f32    conv bias              (grid-invariant)
    # pos_ref: (TN, D)     f32    position embedding rows for this token-tile
    # o_ref  : (1, TN, D)  f32
    x = xp_ref[0]                                                    # [TN, K]
    y = jnp.dot(x, w_ref[...], preferred_element_type=jnp.float32)  # MXU, f32 acc
    o_ref[0] = (y + b_ref[...] + pos_ref[...]).astype(o_ref.dtype)


# ------------------------------ plain-JAX glue ------------------------------
def extract_patches(pixel_values, patch_size):
    """NCHW -> [B, N, C*P*P]; features flattened in (C, Ph, Pw) order to match
    torch Conv2d weight [D, C, P, P] flattening (stride==kernel 'valid' conv)."""
    B, C, H, W = pixel_values.shape
    P = patch_size
    x = pixel_values.reshape(B, C, H // P, P, W // P, P)
    x = x.transpose(0, 2, 4, 1, 3, 5)            # [B, H/P, W/P, C, P, P]
    return x.reshape(B, (H // P) * (W // P), C * P * P)


# -------------------------------- wrapper --------------------------------
def siglip_vision_embeddings(pixel_values, patch_w, patch_b, pos_emb,
                             patch_size, tn=128):
    """patch_w: [K, D] bf16, patch_b: [1, D] f32, pos_emb: [N, D] f32."""
    patches = extract_patches(pixel_values, patch_size).astype(jnp.bfloat16)
    B, N, K = patches.shape
    D = patch_w.shape[1]

    # Token tile: multiple of 8 (sublane rule) that divides N, else whole N.
    if tn is None or tn > N or N % tn != 0 or tn % 8 != 0:
        tn = N
    grid = (B, N // tn)

    return pl.pallas_call(
        embed_kernel,
        out_shape=jax.ShapeDtypeStruct((B, N, D), jnp.float32),
        grid=grid,
        in_specs=[
            pl.BlockSpec((1, tn, K), lambda b, n: (b, n, 0)),   # patch rows
            pl.BlockSpec((K, D), lambda b, n: (0, 0)),          # weight (resident)
            pl.BlockSpec((1, D), lambda b, n: (0, 0)),          # bias   (resident)
            pl.BlockSpec((tn, D), lambda b, n: (n, 0)),         # pos-emb rows
        ],
        out_specs=pl.BlockSpec((1, tn, D), lambda b, n: (b, n, 0)),
        compiler_params=pltpu.CompilerParams(
            dimension_semantics=("parallel", "parallel")),
    )(patches, patch_w, patch_b, pos_emb)


# ----------------------------- pure-JAX reference -----------------------------
def reference(pixel_values, patch_w, patch_b, pos_emb, patch_size):
    patches = extract_patches(pixel_values, patch_size)
    # Match the kernel's bf16 operands, f32 accumulation.
    p = patches.astype(jnp.bfloat16).astype(jnp.float32)
    w = patch_w.astype(jnp.float32)
    y = jnp.dot(p, w, precision=jax.lax.Precision.HIGHEST)
    return y + patch_b + pos_emb[None]


# ----------------------------------- main -----------------------------------
if __name__ == "__main__":
    # Small shapes consistent with the module: B=2, C=3, 64x64 image, 4x4
    # patches -> N = 256 tokens, K = C*P*P = 48, hidden D = 32.
    cfg = dict(hidden_size=32, num_channels=3, image_size=64, patch_size=4)
    B = 2
    C, P, D = cfg["num_channels"], cfg["patch_size"], cfg["hidden_size"]
    N = (cfg["image_size"] // P) ** 2
    K = C * P * P

    key = jax.random.PRNGKey(0)
    k_w, k_b, k_pos, k_x = jax.random.split(key, 4)
    patch_w = (jax.random.normal(k_w, (K, D), jnp.float32) * 0.02).astype(jnp.bfloat16)
    patch_b = jax.random.normal(k_b, (1, D), jnp.float32) * 0.02
    pos_emb = jax.random.normal(k_pos, (N, D), jnp.float32) * 0.02
    pixel_values = jax.random.normal(
        k_x, (B, C, cfg["image_size"], cfg["image_size"]), jnp.float32)

    out = siglip_vision_embeddings(pixel_values, patch_w, patch_b, pos_emb,
                                   P, tn=128)
    out = jax.block_until_ready(out)

    ref = jax.block_until_ready(
        reference(pixel_values, patch_w, patch_b, pos_emb, P))

    assert out.shape == ref.shape == (B, N, D), (out.shape, ref.shape)
    max_err = jnp.max(jnp.abs(out - ref))
    assert jnp.allclose(out, ref, rtol=1e-4, atol=1e-4), f"max abs err {max_err}"
    print("KERNEL_OK")
</pallas_src>

<mosaic_0001>
module attributes {stable_mosaic.version = 11 : i64} {
  func.func @embed_kernel(%arg0: i32, %arg1: i32, %arg2: memref<1x128x48xbf16, #tpu.memory_space<vmem>>, %arg3: memref<48x32xbf16, #tpu.memory_space<vmem>>, %arg4: memref<1x32xf32, #tpu.memory_space<vmem>>, %arg5: memref<128x32xf32, #tpu.memory_space<vmem>>, %arg6: memref<1x128x32xf32, #tpu.memory_space<vmem>>) attributes {dimension_semantics = [#tpu.dimension_semantics<parallel>, #tpu.dimension_semantics<parallel>], iteration_bounds = array<i64: 2, 2>, scalar_prefetch = 0 : i64, scratch_operands = 0 : i64, tpu.core_type = #tpu.core_type<tc>, window_params = [{transform_indices = @transform_0, window_bounds = array<i64: 1, 128, 48>}, {pipeline_mode = #tpu.pipeline_mode<synchronous>, transform_indices = @transform_1, window_bounds = array<i64: 48, 32>}, {pipeline_mode = #tpu.pipeline_mode<synchronous>, transform_indices = @transform_2, window_bounds = array<i64: 1, 32>}, {transform_indices = @transform_3, window_bounds = array<i64: 128, 32>}, {transform_indices = @transform_4, window_bounds = array<i64: 1, 128, 32>}]} {
    %c0 = arith.constant 0 : index
    %c0_0 = arith.constant 0 : index
    %c0_1 = arith.constant 0 : index
    %0 = vector.load %arg2[%c0, %c0_0, %c0_1] : memref<1x128x48xbf16, #tpu.memory_space<vmem>>, vector<1x128x48xbf16>
    %1 = vector.shape_cast %0 : vector<1x128x48xbf16> to vector<128x48xbf16>
    %c0_2 = arith.constant 0 : index
    %c0_3 = arith.constant 0 : index
    %2 = vector.load %arg3[%c0_2, %c0_3] : memref<48x32xbf16, #tpu.memory_space<vmem>>, vector<48x32xbf16>
    %cst = arith.constant dense<0.000000e+00> : vector<128x32xf32>
    %3 = tpu.matmul %1, %2, %cst {dimension_numbers = #tpu.dot_dimension_numbers<[1], [0], [0], [1], [0, 0, 1, 1], [], []>} : vector<128x48xbf16>, vector<48x32xbf16>, vector<128x32xf32> -> vector<128x32xf32>
    %c0_4 = arith.constant 0 : index
    %c0_5 = arith.constant 0 : index
    %4 = vector.load %arg4[%c0_4, %c0_5] : memref<1x32xf32, #tpu.memory_space<vmem>>, vector<1x32xf32>
    %5 = vector.broadcast %4 : vector<1x32xf32> to vector<128x32xf32>
    %6 = arith.addf %3, %5 : vector<128x32xf32>
    %c0_6 = arith.constant 0 : index
    %c0_7 = arith.constant 0 : index
    %7 = vector.load %arg5[%c0_6, %c0_7] : memref<128x32xf32, #tpu.memory_space<vmem>>, vector<128x32xf32>
    %8 = arith.addf %6, %7 : vector<128x32xf32>
    %c0_8 = arith.constant 0 : index
    %c0_9 = arith.constant 0 : index
    %c0_10 = arith.constant 0 : index
    %9 = vector.load %arg6[%c0_8, %c0_9, %c0_10] : memref<1x128x32xf32, #tpu.memory_space<vmem>>, vector<1x128x32xf32>
    %10 = vector.shape_cast %9 : vector<1x128x32xf32> to vector<128x32xf32>
    %11 = vector.shape_cast %8 : vector<128x32xf32> to vector<1x128x32xf32>
    tpu.vector_store %arg6[%c0_8, %c0_9, %c0_10], %11 {strides = array<i32>} : memref<1x128x32xf32, #tpu.memory_space<vmem>>, vector<1x128x32xf32>,
    return
  }
  func.func @transform_0(%arg0: i32, %arg1: i32) -> (i32, i32, i32) {
    %c0_i32 = arith.constant 0 : i32
    %c0_i32_0 = arith.constant 0 : i32
    return %arg0, %arg1, %c0_i32 : i32, i32, i32
  }
  func.func @transform_1(%arg0: i32, %arg1: i32) -> (i32, i32) {
    %c0_i32 = arith.constant 0 : i32
    %c0_i32_0 = arith.constant 0 : i32
    %c0_i32_1 = arith.constant 0 : i32
    return %c0_i32, %c0_i32_0 : i32, i32
  }
  func.func @transform_2(%arg0: i32, %arg1: i32) -> (i32, i32) {
    %c0_i32 = arith.constant 0 : i32
    %c0_i32_0 = arith.constant 0 : i32
    %c0_i32_1 = arith.constant 0 : i32
    return %c0_i32, %c0_i32_0 : i32, i32
  }
  func.func @transform_3(%arg0: i32, %arg1: i32) -> (i32, i32) {
    %c0_i32 = arith.constant 0 : i32
    %c0_i32_0 = arith.constant 0 : i32
    return %arg1, %c0_i32 : i32, i32
  }
  func.func @transform_4(%arg0: i32, %arg1: i32) -> (i32, i32, i32) {
    %c0_i32 = arith.constant 0 : i32
    %c0_i32_0 = arith.constant 0 : i32
    return %arg0, %arg1, %c0_i32 : i32, i32, i32
  }
}

</mosaic_0001>

<llo_original>
// kernel: tpu_custom_call.1
$region0: #{tpu_custom_call.1}
  #allocation0 [shape = 'u32[]', space=smem, size = 0x4, offset = 0x4, fixed_abs, tag = 'smem constant byte address 0x4 - core index']
  #allocation1 [shape = 'u32[144,128]{1,0:T(1,128)}', space=vmem, size = 0x12000, scoped, tag = 'internal scratch']
  %s0 = inlined_call_operand.vmem [shape: bf16[2,256,48], index: 0, kind: input, shape index: {}]
  %s1 = inlined_call_operand.vmem [shape: bf16[48,32], index: 1, kind: input, shape index: {}]
  %s2 = inlined_call_operand.vmem [shape: f32[1,32], index: 2, kind: input, shape index: {}]
  %s3 = inlined_call_operand.vmem [shape: f32[256,32], index: 3, kind: input, shape index: {}]
  %s4 = inlined_call_operand.vmem [shape: f32[2,256,32], index: 4, kind: output, shape index: {}]
  %s5 = sld [smem:[#allocation0]]
  $region49: #{tpu_custom_call.1} parent=0
    _
  %s7 = ssub.s32 1, %s5
  %s8 = scalar_select 0, %s7, %s5
  loop: start=0, step=1, limit=6
  $region2: #{tpu_custom_call.1} parent=0 // loop_pre_header
    _
  $region3: #{tpu_custom_call.1} parent=0 // loop_header
    %s10 = sphi 0, %s14
    %p11 = scmp.ge.s32.totalorder %s10, 6
    %s17 = sphi 0, %s29
    %s18 = sphi 0, %s25
    %s19 = sphi 0, %s17
    %s20 = sphi 0, %s18
    %s21 = sphi 0, %s19
    %s22 = sphi 0, %s20
    %s34 = sphi 0, %s36
    %s37 = sphi 0, %s34
    %s38 = sphi 0, %s37
    %s54 = sphi 0, %s38
    %s58 = sphi 0, %s58
    %s60 = sphi 0, %s58
    %s61 = sphi 0, %s60
    %s75 = sphi 0, %s61
    %s79 = sphi 0, %s79
    %s81 = sphi 0, %s79
    %s82 = sphi 0, %s81
    %s96 = sphi 0, %s82
    %s102 = sphi 0, %s104
    %s105 = sphi 0, %s102
    %s106 = sphi 0, %s105
    %s122 = sphi 0, %s106
    %s130 = sphi 0, %s132
    %s133 = sphi 0, %s130
    %s134 = sphi 0, %s133
    %s150 = sphi 0, %s134
  $region4: #{tpu_custom_call.1} parent=0 // loop_header_branch
    %13 = sbr.rel (%p11) target = $region8
  $region5: #{tpu_custom_call.1} parent=0 // loop_body
    %s15 = ssub.s32 %s10, 1
    %s16 = ssub.s32 %s10, 2
    %s23 = sadd.s32 1, %s18
    %p24 = scmp.ge.s32.totalorder %s23, 2
    %s25 = scalar_select %p24, 0, %s23
    %s26 = sadd.s32 1, %s17
    %s27 = scalar_select %p24, %s26, %s17
    %p28 = scmp.ge.s32.totalorder %s27, 2
    %s29 = scalar_select %p28, 0, %s27
    %s30 = ssub.s32 %s17, %s29
    %s31 = ssub.s32 %s18, %s25
    %s32 = sor.u32 %s30, %s31
    %p33 = scmp.eq.s32.totalorder %s32, 0
    %s35 = sadd.s32 %s34, 1
    %s36 = scalar_select %p33, %s34, %s35
    %p39 = pneg %p33
    %p40 = scmp.eq.s32.totalorder %s10, 3
    %p41 = por %p39, %p40
    %p42 = scmp.ne.s32.totalorder %s34, %s37
    %p43 = scmp.eq.s32.totalorder %s10, 0
    %p44 = por %p42, %p43
    %p45 = scmp.ne.s32.totalorder %s34, %s37
    %p46 = scmp.eq.s32.totalorder %s15, 3
    %p47 = por %p45, %p46
    %p48 = scmp.ne.s32.totalorder %s37, %s38
    %p49 = scmp.eq.s32.totalorder %s15, 0
    %p50 = por %p48, %p49
    %p51 = scmp.ne.s32.totalorder %s37, %s38
    %p52 = scmp.eq.s32.totalorder %s16, 3
    %p53 = por %p51, %p52
    %p55 = scmp.ne.s32.totalorder %s38, %s54
    %p56 = scmp.eq.s32.totalorder %s16, 0
    %p57 = por %p55, %p56
    %s59 = sadd.s32 %s58, 1
    %p62 = scmp.eq.s32.totalorder %s10, 3
    %p63 = scmp.ne.s32.totalorder %s58, %s60
    %p64 = scmp.eq.s32.totalorder %s10, 0
    %p65 = por %p63, %p64
    %p66 = scmp.ne.s32.totalorder %s58, %s60
    %p67 = scmp.eq.s32.totalorder %s15, 3
    %p68 = por %p66, %p67
    %p69 = scmp.ne.s32.totalorder %s60, %s61
    %p70 = scmp.eq.s32.totalorder %s15, 0
    %p71 = por %p69, %p70
    %p72 = scmp.ne.s32.totalorder %s60, %s61
    %p73 = scmp.eq.s32.totalorder %s16, 3
    %p74 = por %p72, %p73
    %p76 = scmp.ne.s32.totalorder %s61, %s75
    %p77 = scmp.eq.s32.totalorder %s16, 0
    %p78 = por %p76, %p77
    %s80 = sadd.s32 %s79, 1
    %p83 = scmp.eq.s32.totalorder %s10, 3
    %p84 = scmp.ne.s32.totalorder %s79, %s81
    %p85 = scmp.eq.s32.totalorder %s10, 0
    %p86 = por %p84, %p85
    %p87 = scmp.ne.s32.totalorder %s79, %s81
    %p88 = scmp.eq.s32.totalorder %s15, 3
    %p89 = por %p87, %p88
    %p90 = scmp.ne.s32.totalorder %s81, %s82
    %p91 = scmp.eq.s32.totalorder %s15, 0
    %p92 = por %p90, %p91
    %p93 = scmp.ne.s32.totalorder %s81, %s82
    %p94 = scmp.eq.s32.totalorder %s16, 3
    %p95 = por %p93, %p94
    %p97 = scmp.ne.s32.totalorder %s82, %s96
    %p98 = scmp.eq.s32.totalorder %s16, 0
    %p99 = por %p97, %p98
    %s100 = ssub.s32 %s18, %s25
    %p101 = scmp.eq.s32.totalorder %s100, 0
    %s103 = sadd.s32 %s102, 1
    %s104 = scalar_select %p101, %s102, %s103
    %p107 = pneg %p101
    %p108 = scmp.eq.s32.totalorder %s10, 3
    %p109 = por %p107, %p108
    %p110 = scmp.ne.s32.totalorder %s102, %s105
    %p111 = scmp.eq.s32.totalorder %s10, 0
    %p112 = por %p110, %p111
    %p113 = scmp.ne.s32.totalorder %s102, %s105
    %p114 = scmp.eq.s32.totalorder %s15, 3
    %p115 = por %p113, %p114
    %p116 = scmp.ne.s32.totalorder %s105, %s106
    %p117 = scmp.eq.s32.totalorder %s15, 0
    %p118 = por %p116, %p117
    %p119 = scmp.ne.s32.totalorder %s105, %s106
    %p120 = scmp.eq.s32.totalorder %s16, 3
    %p121 = por %p119, %p120
    %p123 = scmp.ne.s32.totalorder %s106, %s122
    %p124 = scmp.eq.s32.totalorder %s16, 0
    %p125 = por %p123, %p124
    %s126 = ssub.s32 %s17, %s29
    %s127 = ssub.s32 %s18, %s25
    %s128 = sor.u32 %s126, %s127
    %p129 = scmp.eq.s32.totalorder %s128, 0
    %s131 = sadd.s32 %s130, 1
    %s132 = scalar_select %p129, %s130, %s131
    %p135 = pneg %p129
    %p136 = scmp.eq.s32.totalorder %s10, 3
    %p137 = por %p135, %p136
    %p138 = scmp.ne.s32.totalorder %s130, %s133
    %p139 = scmp.eq.s32.totalorder %s10, 0
    %p140 = por %p138, %p139
    %p141 = scmp.ne.s32.totalorder %s130, %s133
    %p142 = scmp.eq.s32.totalorder %s15, 3
    %p143 = por %p141, %p142
    %p144 = scmp.ne.s32.totalorder %s133, %s134
    %p145 = scmp.eq.s32.totalorder %s15, 0
    %p146 = por %p144, %p145
    %p147 = scmp.ne.s32.totalorder %s133, %s134
    %p148 = scmp.eq.s32.totalorder %s16, 3
    %p149 = por %p147, %p148
    %p151 = scmp.ne.s32.totalorder %s134, %s150
    %p152 = scmp.eq.s32.totalorder %s16, 0
    %p153 = por %p151, %p152
    %p154 = scmp.le.s32.totalorder 1, %s10
    %p155 = scmp.lt.s32.totalorder %s10, 5
    %p156 = pnand %p154, %p155
    %p157 = pneg %p156
    // Predicated region
    $region9: #{tpu_custom_call.1} parent=5 // pred_check
      _
    $region10: #{tpu_custom_call.1} parent=5 // pred_check_branch
      %159 = sbr.rel (%p156) target = $region12
    $region11: #{tpu_custom_call.1} parent=5 // pred_region
      %s160 = ssub.s32 %s10, 1
      // Predicated region
      $region13: #{tpu_custom_call.1} parent=11 // pred_check
        %p161 = pneg %p71
      $region14: #{tpu_custom_call.1} parent=11 // pred_check_branch
        %163 = sbr.rel (%p161) target = $region16
      $region15: #{tpu_custom_call.1} parent=11 // pred_region
        _
      $region16: #{tpu_custom_call.1} parent=11 // pred_fallthru
        _
      // Predicated region
      $region17: #{tpu_custom_call.1} parent=11 // pred_check
        %p164 = pneg %p92
      $region18: #{tpu_custom_call.1} parent=11 // pred_check_branch
        %166 = sbr.rel (%p164) target = $region20
      $region19: #{tpu_custom_call.1} parent=11 // pred_region
        _
      $region20: #{tpu_custom_call.1} parent=11 // pred_fallthru
        _
    $region12: #{tpu_custom_call.1} parent=5 // pred_fallthru
      _
    %p167 = scmp.lt.s32.totalorder %s10, 4
    // Predicated region
    $region21: #{tpu_custom_call.1} parent=5 // pred_check
      %p168 = pneg %p167
    $region22: #{tpu_custom_call.1} parent=5 // pred_check_branch
      %170 = sbr.rel (%p168) target = $region24
    $region23: #{tpu_custom_call.1} parent=5 // pred_region
      // Predicated region
      $region25: #{tpu_custom_call.1} parent=23 // pred_check
        %p171 = pneg %p44
      $region26: #{tpu_custom_call.1} parent=23 // pred_check_branch
        %173 = sbr.rel (%p171) target = $region28
      $region27: #{tpu_custom_call.1} parent=23 // pred_region
        %s174 = smul.u32 16, %s18
        %p175 = scmp.lt.s32.totalorder %s17, 1
        %s176 = scalar_select %p175, %s17, 1
        %p177 = scmp.lt.s32.totalorder %s174, 31
        %s178 = scalar_select %p177, %s174, 31
        %s179 = smul.addr %s176, 32
        %s180 = sadd.s32 %s178, %s179
        %s181 = smul.addr %s180, 4
        %s182 = scalar_lea.vmem %s0, %s181
        %s183 = smul.u32 16, %s18
      $region28: #{tpu_custom_call.1} parent=23 // pred_fallthru
        _
      // Predicated region
      $region29: #{tpu_custom_call.1} parent=23 // pred_check
        %p184 = pneg %p112
      $region30: #{tpu_custom_call.1} parent=23 // pred_check_branch
        %186 = sbr.rel (%p184) target = $region32
      $region31: #{tpu_custom_call.1} parent=23 // pred_region
        %s187 = smul.u32 16, %s18
        %p188 = scmp.lt.s32.totalorder %s187, 31
        %s189 = scalar_select %p188, %s187, 31
        %s190 = smul.addr %s189, 8
        %s191 = scalar_lea.vmem %s3, %s190
        %s192 = smul.u32 16, %s18
      $region32: #{tpu_custom_call.1} parent=23 // pred_fallthru
        _
    $region24: #{tpu_custom_call.1} parent=5 // pred_fallthru
      _
    %p193 = scmp.le.s32.totalorder 1, %s10
    %p194 = scmp.lt.s32.totalorder %s10, 5
    %p195 = pnand %p193, %p194
    %p196 = pneg %p195
    // Predicated region
    $region33: #{tpu_custom_call.1} parent=5 // pred_check
      _
    $region34: #{tpu_custom_call.1} parent=5 // pred_check_branch
      %198 = sbr.rel (%p195) target = $region36
    $region35: #{tpu_custom_call.1} parent=5 // pred_region
      %s199 = ssub.s32 %s10, 1
      %s200 = smul.u32 16, %s20
      %p201 = scmp.lt.s32.totalorder %s19, 1
      %s202 = scalar_select %p201, %s19, 1
      %p203 = scmp.lt.s32.totalorder %s200, 31
      %s204 = scalar_select %p203, %s200, 31
      %s205 = smul.addr %s202, 32
      %s206 = sadd.s32 %s204, %s205
      %s207 = smul.addr %s206, 4
      %s208 = scalar_lea.vmem %s0, %s207
      %p209 = pneg %p50
      %p210 = pneg %p47
      %p211 = pneg %p71
      %p212 = pneg %p68
      %p213 = pneg %p92
      %p214 = pneg %p89
      %s215 = smul.u32 16, %s20
      %p216 = scmp.lt.s32.totalorder %s215, 31
      %s217 = scalar_select %p216, %s215, 31
      %s218 = smul.addr %s217, 8
      %s219 = scalar_lea.vmem %s3, %s218
      %p220 = pneg %p118
      %p221 = pneg %p115
      %p222 = pneg %p146
      %p223 = pneg %p143
      %s224 = smul.u32 16, %s20
      %p225 = scmp.lt.s32.totalorder %s19, 1
      %s226 = scalar_select %p225, %s19, 1
      %p227 = scmp.lt.s32.totalorder %s224, 31
      %s228 = scalar_select %p227, %s224, 31
      %s229 = smul.addr %s226, 32
      %s230 = sadd.s32 %s228, %s229
      %s231 = smul.addr %s230, 8
      %s232 = scalar_lea.vmem %s4, %s231
      %s233 = smul.u32 16, %s20
      %p234 = scmp.lt.s32.totalorder %s19, 1
      %s235 = scalar_select %p234, %s19, 1
      %p236 = scmp.lt.s32.totalorder %s233, 31
      %s237 = scalar_select %p236, %s233, 31
      %s238 = smul.addr %s235, 32
      %s239 = sadd.s32 %s237, %s238
      %s240 = smul.addr %s239, 4
      %s241 = scalar_lea.vmem %s0, %s240
      %s242 = smul.u32 16, %s20
      %s243 = smul.u32 16, %s20
      %p244 = scmp.lt.s32.totalorder %s243, 31
      %s245 = scalar_select %p244, %s243, 31
      %s246 = smul.addr %s245, 8
      %s247 = scalar_lea.vmem %s3, %s246
      %s248 = smul.u32 16, %s20
      %s249 = smul.u32 16, %s20
      %p250 = scmp.lt.s32.totalorder %s19, 1
      %s251 = scalar_select %p250, %s19, 1
      %p252 = scmp.lt.s32.totalorder %s249, 31
      %s253 = scalar_select %p252, %s249, 31
      %s254 = smul.addr %s251, 32
      %s255 = sadd.s32 %s253, %s254
      %s256 = smul.addr %s255, 8
      %s257 = scalar_lea.vmem %s4, %s256
      %s258 = smul.u32 16, %s20
      %v260 = vld [vmem:[%s241] sm:$0xf]
      %v261 = vld [vmem:[%s241 + $0x4] sm:$0xf]
      %v262 = vld [vmem:[%s241 + $0x8] sm:$0xf]
      %v263 = vld [vmem:[%s241 + $0xc] sm:$0xf]
      %v264 = vld [vmem:[%s241 + $0x10] sm:$0xf]
      %v265 = vld [vmem:[%s241 + $0x14] sm:$0xf]
      %v266 = vld [vmem:[%s241 + $0x18] sm:$0xf]
      %v267 = vld [vmem:[%s241 + $0x1c] sm:$0xf]
      %v268 = vld [vmem:[%s241 + $0x20] sm:$0xf]
      %v269 = vld [vmem:[%s241 + $0x24] sm:$0xf]
      %v270 = vld [vmem:[%s241 + $0x28] sm:$0xf]
      %v271 = vld [vmem:[%s241 + $0x2c] sm:$0xf]
      %v272 = vld [vmem:[%s241 + $0x30] sm:$0xf]
      %v273 = vld [vmem:[%s241 + $0x34] sm:$0xf]
      %v274 = vld [vmem:[%s241 + $0x38] sm:$0xf]
      %v275 = vld [vmem:[%s241 + $0x3c] sm:$0xf]
      %v276 = vld [vmem:[%s1] sm:$0xf]
      %v277 = vld [vmem:[%s1 + $0x4] sm:$0xf]
      %v278 = vld [vmem:[%s1 + $0x8] sm:$0xf]
      %v279 = vld [vmem:[%s1 + $0xc] sm:$0xf]
      %v280 = vld [vmem:[%s1 + $0x10] sm:$0xf]
      %v281 = vld [vmem:[%s1 + $0x14] sm:$0xf]
      %v282 = vld [vmem:[%s2] sm:$0x1]
      %v284 = vlaneseq
      %v285 = vshrl.u32 %v284, 7
      %v286 = vsub.s32 0, %v285
      %v287 = vrot.slane %v282, %v286
      %v305 = vunpack.c.l.b16 %v260
      %v306 = vunpack.c.l.b16 %v261
      %v307 = vunpack.c.l.b16 %v262
      %v308 = vunpack.c.l.b16 %v263
      %v309 = vunpack.c.l.b16 %v264
      %v310 = vunpack.c.l.b16 %v265
      %v311 = vunpack.c.l.b16 %v266
      %v312 = vunpack.c.l.b16 %v267
      %v313 = vunpack.c.l.b16 %v268
      %v314 = vunpack.c.l.b16 %v269
      %v315 = vunpack.c.l.b16 %v270
      %v316 = vunpack.c.l.b16 %v271
      %v317 = vunpack.c.l.b16 %v272
      %v318 = vunpack.c.l.b16 %v273
      %v319 = vunpack.c.l.b16 %v274
      %v320 = vunpack.c.l.b16 %v275
      %v321 = vpack.c.b16 %v306, %v305
      %v322 = vpack.c.b16 %v308, %v307
      %v323 = vpack.c.b16 %v310, %v309
      %v324 = vpack.c.b16 %v312, %v311
      %v325 = vpack.c.b16 %v314, %v313
      %v326 = vpack.c.b16 %v316, %v315
      %v327 = vpack.c.b16 %v318, %v317
      %v328 = vpack.c.b16 %v320, %v319
      %v335 = vunpack.c.l.b16 %v276
      %v336 = vunpack.c.l.b16 %v277
      %v337 = vunpack.c.l.b16 %v278
      %v338 = vunpack.c.l.b16 %v279
      %v339 = vunpack.c.l.b16 %v280
      %v340 = vunpack.c.l.b16 %v281
      %v341 = vpack.c.b16 %v336, %v335
      %v342 = vpack.c.b16 %v338, %v337
      %v343 = vpack.c.b16 %v340, %v339
      %vm347 = vcmask 392192
      %v349 = vsel %vm347, %v321, 0
      %v352 = vsel %vm347, %v322, 0
      %v355 = vsel %vm347, %v323, 0
      %v358 = vsel %vm347, %v324, 0
      %v361 = vsel %vm347, %v325, 0
      %v364 = vsel %vm347, %v326, 0
      %v367 = vsel %vm347, %v327, 0
      %v370 = vsel %vm347, %v328, 0
      %372 = vmatprep.subr.bf16.mxu0 0
      %373 = vmatpush1.bf16.msra.mxu0 0
      %374 = vmatprep.subr.bf16.mxu0 0
      %375 = vmatpush1.bf16.msra.mxu0 0
      %376 = vmatprep.subr.bf16.mxu0 0
      %377 = vmatpush1.bf16.msra.mxu0 0
      %378 = vmatprep.subr.bf16.mxu0 0
      %379 = vmatpush1.bf16.msra.mxu0 0
      %380 = vmatprep.subr.bf16.mxu0 0
      %381 = vmatpush1.bf16.msra.mxu0 0
      %382 = vmatprep.subr.bf16.mxu0 0
      %383 = vmatpush1.bf16.msra.mxu0 %v343
      %384 = vmatprep.subr.bf16.mxu0 0
      %385 = vmatpush1.bf16.msra.mxu0 %v342
      %386 = vmatprep.subr.bf16.mxu0 0
      %387 = vmatpush1.bf16.msra.mxu0 %v341
      %388 = vmatprep.subr.bf16.mxu0 0
      %389 = vmatpush2.bf16.msra.mxu0 0
      %390 = vmatprep.subr.bf16.mxu0 0
      %391 = vmatpush2.bf16.msra.mxu0 0
      %392 = vmatprep.subr.bf16.mxu0 0
      %393 = vmatpush2.bf16.msra.mxu0 0
      %394 = vmatprep.subr.bf16.mxu0 0
      %395 = vmatpush2.bf16.msra.mxu0 0
      %396 = vmatprep.subr.bf16.mxu0 0
      %397 = vmatpush2.bf16.msra.mxu0 0
      %398 = vmatprep.subr.bf16.mxu0 0
      %399 = vmatpush2.bf16.msra.mxu0 0
      %400 = vmatprep.subr.bf16.mxu0 0
      %401 = vmatpush2.bf16.msra.mxu0 0
      %402 = vmatprep.subr.bf16.mxu0 0
      %403 = vmatpush2.bf16.msra.mxu0 0
      %404 = vmatprep.mubr.bf16.mxu0 0
      %405 = vmatmul.mubr.bf16.gmra.mxu0 %v349
      %v406 = vpop.f32.mrf.mxu0
      %v407 = vadd.f32 %v287, %v406
      %v408 = vpop.f32.mrf.mxu0
      %v409 = vpop.f32.mrf.mxu0
      %v410 = vadd.f32 %v287, %v409
      %v411 = vpop.f32.mrf.mxu0
      %412 = vmatprep.mubr.bf16.mxu0 0
      %413 = vmatmul.mubr.bf16.gmra.mxu0 %v352
      %v414 = vpop.f32.mrf.mxu0
      %v415 = vadd.f32 %v287, %v414
      %v416 = vpop.f32.mrf.mxu0
      %v417 = vpop.f32.mrf.mxu0
      %v418 = vadd.f32 %v287, %v417
      %v419 = vpop.f32.mrf.mxu0
      %420 = vmatprep.mubr.bf16.mxu0 0
      %421 = vmatmul.mubr.bf16.gmra.mxu0 %v355
      %v422 = vpop.f32.mrf.mxu0
      %v423 = vadd.f32 %v287, %v422
      %v424 = vpop.f32.mrf.mxu0
      %v425 = vpop.f32.mrf.mxu0
      %v426 = vadd.f32 %v287, %v425
      %v427 = vpop.f32.mrf.mxu0
      %428 = vmatprep.mubr.bf16.mxu0 0
      %429 = vmatmul.mubr.bf16.gmra.mxu0 %v358
      %v430 = vpop.f32.mrf.mxu0
      %v431 = vadd.f32 %v287, %v430
      %v432 = vpop.f32.mrf.mxu0
      %v433 = vpop.f32.mrf.mxu0
      %v434 = vadd.f32 %v287, %v433
      %v435 = vpop.f32.mrf.mxu0
      %436 = vmatprep.mubr.bf16.mxu0 0
      %437 = vmatmul.mubr.bf16.gmra.mxu0 %v361
      %v438 = vpop.f32.mrf.mxu0
      %v439 = vadd.f32 %v287, %v438
      %v440 = vpop.f32.mrf.mxu0
      %v441 = vpop.f32.mrf.mxu0
      %v442 = vadd.f32 %v287, %v441
      %v443 = vpop.f32.mrf.mxu0
      %444 = vmatprep.mubr.bf16.mxu0 0
      %445 = vmatmul.mubr.bf16.gmra.mxu0 %v364
      %v446 = vpop.f32.mrf.mxu0
      %v447 = vadd.f32 %v287, %v446
      %v448 = vpop.f32.mrf.mxu0
      %v449 = vpop.f32.mrf.mxu0
      %v450 = vadd.f32 %v287, %v449
      %v451 = vpop.f32.mrf.mxu0
      %452 = vmatprep.mubr.bf16.mxu0 0
      %453 = vmatmul.mubr.bf16.gmra.mxu0 %v367
      %v454 = vpop.f32.mrf.mxu0
      %v455 = vadd.f32 %v287, %v454
      %v456 = vpop.f32.mrf.mxu0
      %v457 = vpop.f32.mrf.mxu0
      %v458 = vadd.f32 %v287, %v457
      %v459 = vpop.f32.mrf.mxu0
      %460 = vmatprep.mubr.bf16.mxu0 0
      %461 = vmatmul.mubr.bf16.gmra.mxu0 %v370
      %v462 = vpop.f32.mrf.mxu0
      %v463 = vadd.f32 %v287, %v462
      %v464 = vpop.f32.mrf.mxu0
      %v465 = vpop.f32.mrf.mxu0
      %v466 = vadd.f32 %v287, %v465
      %v467 = vpop.f32.mrf.mxu0
      %468 = vdwg.mxu0
      %v469 = vld [vmem:[%s247] sm:$0xff]
      %v470 = vld [vmem:[%s247 + $0x8] sm:$0xff]
      %v471 = vld [vmem:[%s247 + $0x10] sm:$0xff]
      %v472 = vld [vmem:[%s247 + $0x18] sm:$0xff]
      %v473 = vld [vmem:[%s247 + $0x20] sm:$0xff]
      %v474 = vld [vmem:[%s247 + $0x28] sm:$0xff]
      %v475 = vld [vmem:[%s247 + $0x30] sm:$0xff]
      %v476 = vld [vmem:[%s247 + $0x38] sm:$0xff]
      %v477 = vld [vmem:[%s247 + $0x40] sm:$0xff]
      %v478 = vld [vmem:[%s247 + $0x48] sm:$0xff]
      %v479 = vld [vmem:[%s247 + $0x50] sm:$0xff]
      %v480 = vld [vmem:[%s247 + $0x58] sm:$0xff]
      %v481 = vld [vmem:[%s247 + $0x60] sm:$0xff]
      %v482 = vld [vmem:[%s247 + $0x68] sm:$0xff]
      %v483 = vld [vmem:[%s247 + $0x70] sm:$0xff]
      %v484 = vld [vmem:[%s247 + $0x78] sm:$0xff]
      %v485 = vadd.f32 %v407, %v469
      %v486 = vadd.f32 %v410, %v470
      %v487 = vadd.f32 %v415, %v471
      %v488 = vadd.f32 %v418, %v472
      %v489 = vadd.f32 %v423, %v473
      %v490 = vadd.f32 %v426, %v474
      %v491 = vadd.f32 %v431, %v475
      %v492 = vadd.f32 %v434, %v476
      %v493 = vadd.f32 %v439, %v477
      %v494 = vadd.f32 %v442, %v478
      %v495 = vadd.f32 %v447, %v479
      %v496 = vadd.f32 %v450, %v480
      %v497 = vadd.f32 %v455, %v481
      %v498 = vadd.f32 %v458, %v482
      %v499 = vadd.f32 %v463, %v483
      %v500 = vadd.f32 %v466, %v484
      %vm501 = vcmask 261120
      %502 = vst.msk [vmem:[%s257] sm:$0xff] %vm501, %v485
      %503 = vst.msk [vmem:[%s257 + $0x8] sm:$0xff] %vm501, %v486
      %504 = vst.msk [vmem:[%s257 + $0x10] sm:$0xff] %vm501, %v487
      %505 = vst.msk [vmem:[%s257 + $0x18] sm:$0xff] %vm501, %v488
      %506 = vst.msk [vmem:[%s257 + $0x20] sm:$0xff] %vm501, %v489
      %507 = vst.msk [vmem:[%s257 + $0x28] sm:$0xff] %vm501, %v490
      %508 = vst.msk [vmem:[%s257 + $0x30] sm:$0xff] %vm501, %v491
      %509 = vst.msk [vmem:[%s257 + $0x38] sm:$0xff] %vm501, %v492
      %510 = vst.msk [vmem:[%s257 + $0x40] sm:$0xff] %vm501, %v493
      %511 = vst.msk [vmem:[%s257 + $0x48] sm:$0xff] %vm501, %v494
      %512 = vst.msk [vmem:[%s257 + $0x50] sm:$0xff] %vm501, %v495
      %513 = vst.msk [vmem:[%s257 + $0x58] sm:$0xff] %vm501, %v496
      %514 = vst.msk [vmem:[%s257 + $0x60] sm:$0xff] %vm501, %v497
      %515 = vst.msk [vmem:[%s257 + $0x68] sm:$0xff] %vm501, %v498
      %516 = vst.msk [vmem:[%s257 + $0x70] sm:$0xff] %vm501, %v499
      %517 = vst.msk [vmem:[%s257 + $0x78] sm:$0xff] %vm501, %v500
      %s518 = smul.u32 16, %s20
      %p519 = scmp.lt.s32.totalorder %s19, 1
      %s520 = scalar_select %p519, %s19, 1
      %p521 = scmp.lt.s32.totalorder %s518, 31
      %s522 = scalar_select %p521, %s518, 31
      %s523 = smul.addr %s520, 32
      %s524 = sadd.s32 %s522, %s523
      %s525 = smul.addr %s524, 8
      %s526 = scalar_lea.vmem %s4, %s525
      // Predicated region
      $region37: #{tpu_custom_call.1} parent=35 // pred_check
        %p527 = pneg %p143
      $region38: #{tpu_custom_call.1} parent=35 // pred_check_branch
        %529 = sbr.rel (%p527) target = $region40
      $region39: #{tpu_custom_call.1} parent=35 // pred_region
        %s530 = smul.u32 16, %s20
      $region40: #{tpu_custom_call.1} parent=35 // pred_fallthru
        _
    $region36: #{tpu_custom_call.1} parent=5 // pred_fallthru
      _
    %p531 = scmp.le.s32.totalorder 2, %s10
    // Predicated region
    $region41: #{tpu_custom_call.1} parent=5 // pred_check
      %p532 = pneg %p531
    $region42: #{tpu_custom_call.1} parent=5 // pred_check_branch
      %534 = sbr.rel (%p532) target = $region44
    $region43: #{tpu_custom_call.1} parent=5 // pred_region
      %s535 = ssub.s32 %s10, 2
      // Predicated region
      $region45: #{tpu_custom_call.1} parent=43 // pred_check
        %p536 = pneg %p149
      $region46: #{tpu_custom_call.1} parent=43 // pred_check_branch
        %538 = sbr.rel (%p536) target = $region48
      $region47: #{tpu_custom_call.1} parent=43 // pred_region
        %s539 = smul.u32 16, %s22
        %p540 = scmp.lt.s32.totalorder %s21, 1
        %s541 = scalar_select %p540, %s21, 1
        %p542 = scmp.lt.s32.totalorder %s539, 31
        %s543 = scalar_select %p542, %s539, 31
        %s544 = smul.addr %s541, 32
        %s545 = sadd.s32 %s543, %s544
        %s546 = smul.addr %s545, 8
        %s547 = scalar_lea.vmem %s4, %s546
      $region48: #{tpu_custom_call.1} parent=43 // pred_fallthru
        _
    $region44: #{tpu_custom_call.1} parent=5 // pred_fallthru
      _
  $region6: #{tpu_custom_call.1} parent=0 // loop_footer
    %s14 = sadd.s32 1, %s10
  $region7: #{tpu_custom_call.1} parent=0 // loop_footer_branch
    %9 = sbr.rel target = $region3
  $region8: #{tpu_custom_call.1} parent=0 // loop_exit
    _

</llo_original>
